<compile_context>
chip_gen: v5e
topology: v5e:2x2
jax: 0.10.0
libtpu: 0.0.40
codegen_flags: <defaults>
</compile_context>

<pallas_src>
import functools

import jax
import jax.numpy as jnp
from jax.experimental import pallas as pl
from jax.experimental.pallas import tpu as pltpu


# ----------------------------- Pallas kernel ------------------------------ #
def _same_pad_conv_kernel(x_ref, xh_ref, w_ref, b_ref, o_ref, win_ref, *,
                          ksize, dilation, tile_l, co_chunk):
    """One (batch, L-tile) grid step of SamePadConv.

    x_ref   : (1, C_in, tile_l)            this tile's body (padded input)
    xh_ref  : (1, C_in, halo_block)        this tile's right halo (next cols)
    w_ref   : (K, C_out, C_in)             conv taps
    b_ref   : (C_out, 1)                   bias (f32)
    o_ref   : (1, C_out, tile_l)           output tile (NCL, lane-dense)
    win_ref : (C_in, tile_l + halo_block)  scratch window = body ++ halo
    """
    # Assemble the halo'd window with two lane-aligned stores (tile_l and
    # halo_block are both multiples of 128).
    win_ref[:, :tile_l] = x_ref[0]
    win_ref[:, tile_l:] = xh_ref[0]

    c_out = o_ref.shape[1]
    for co in range(0, c_out, co_chunk):
        hi = min(co + co_chunk, c_out)
        # K direct MXU dots accumulated in f32 -- no im2col staging.
        # TODO(synk): the k*dilation tap slices are lane-unaligned loads; for
        # large C_in a pltpu.roll-based realignment (XLU slot) would be cheaper.
        acc = jnp.dot(w_ref[0, co:hi, :], win_ref[:, 0:tile_l],
                      preferred_element_type=jnp.float32)
        for k in range(1, ksize):
            off = k * dilation
            acc = acc + jnp.dot(w_ref[k, co:hi, :],
                                win_ref[:, off:off + tile_l],
                                preferred_element_type=jnp.float32)
        acc = acc + b_ref[co:hi, :]
        o_ref[0, co:hi, :] = acc.astype(o_ref.dtype)


# ------------------------------ Wrapper ------------------------------------ #
def _vmem_capacity_bytes():
    try:
        info = pltpu.get_tpu_info()
        cap = int(getattr(info, "vmem_capacity_bytes", 0))
        if cap > 0:
            return cap
    except Exception:
        pass
    return 64 * 1024 * 1024  # conservative fallback (v7x per-TC)


def same_pad_conv1d(x, weight, bias, dilation=1, *, tile_l=None,
                    compute_in_bf16=False):
    """SamePadConv.forward.  x: (N, C_in, L); weight: (C_out, C_in, K) (torch).

    Returns (N, C_out, L).  The even-receptive-field trim is folded in (the
    kernel never produces the extra trailing column).
    # TODO(synk): groups > 1, stride > 1 and weight_norm are not implemented
    # (the module defaults groups=1, stride=1, weight_norm=False are assumed).
    """
    n, c_in, length = x.shape
    c_out, c_in_w, ksize = weight.shape
    assert c_in_w == c_in

    rf = (ksize - 1) * dilation + 1
    pad = rf // 2
    halo = (ksize - 1) * dilation                     # right overhang per tile
    halo_block = max(128, pl.cdiv(halo, 128) * 128)   # narrow halo DMA block

    compute_dtype = jnp.bfloat16 if compute_in_bf16 else x.dtype
    itemsize = jnp.dtype(compute_dtype).itemsize

    vmem_cap = _vmem_capacity_bytes()
    vmem_limit = min(int(0.7 * vmem_cap), 112 * 1024 * 1024)

    if tile_l is None:
        # Largest 128-multiple tile keeping the per-step footprint
        # (double-buffered in/out blocks + window scratch + f32 accumulator)
        # well inside the budget; amortizes the ~0.35us/step grid overhead.
        per_col = ((2 * c_in + c_in) * itemsize
                   + 2 * c_out * x.dtype.itemsize + 8 * c_out)
        cap_cols = max(halo_block, (vmem_limit // 2) // max(per_col, 1))
        tile_l = min(8192, cap_cols, pl.cdiv(length, halo_block) * halo_block)
    tile_l = max(halo_block, (int(tile_l) // halo_block) * halo_block)

    n_tiles = pl.cdiv(length, tile_l)
    ratio = tile_l // halo_block                      # halo blocks per tile
    l_pad = n_tiles * tile_l + halo_block

    # One-time zero pad: `pad` columns of left "same" padding plus a right
    # tail so every tile body block and its halo block are fully in bounds.
    x_pad = jnp.pad(x, ((0, 0), (0, 0), (pad, l_pad - pad - length)))
    x_pad = x_pad.astype(compute_dtype)

    w_k = jnp.transpose(weight, (2, 0, 1)).astype(compute_dtype)  # (K, Co, Ci)
    b2d = bias.reshape(c_out, 1).astype(jnp.float32)

    co_chunk = c_out if c_out <= 256 else 128
    kernel = functools.partial(
        _same_pad_conv_kernel, ksize=ksize, dilation=dilation,
        tile_l=tile_l, co_chunk=co_chunk)

    return pl.pallas_call(
        kernel,
        out_shape=jax.ShapeDtypeStruct((n, c_out, length), x.dtype),
        grid_spec=pltpu.PrefetchScalarGridSpec(
            num_scalar_prefetch=0,
            grid=(n, n_tiles),
            in_specs=[
                # This tile's body ...
                pl.BlockSpec((1, c_in, tile_l), lambda b, j: (b, 0, j)),
                # ... and its narrow right halo (first halo_block columns of
                # the next tile / zero tail).  Same padded array, second spec.
                pl.BlockSpec((1, c_in, halo_block),
                             lambda b, j: (b, 0, (j + 1) * ratio)),
                pl.BlockSpec((ksize, c_out, c_in), lambda b, j: (0, 0, 0)),
                pl.BlockSpec((c_out, 1), lambda b, j: (0, 0)),
            ],
            out_specs=pl.BlockSpec((1, c_out, tile_l), lambda b, j: (b, 0, j)),
            scratch_shapes=[
                pltpu.VMEM((c_in, tile_l + halo_block), compute_dtype),
            ],
        ),
        compiler_params=pltpu.CompilerParams(
            dimension_semantics=("parallel", "parallel"),
            vmem_limit_bytes=vmem_limit,
        ),
    )(x_pad, x_pad, w_k, b2d)


# ----------------------- pure-JAX reference (check) ------------------------ #
def _ref_same_pad_conv(x, w, b, dilation):
    k = w.shape[2]
    rf = (k - 1) * dilation + 1
    pad = rf // 2
    out = jax.lax.conv_general_dilated(
        x, w, window_strides=(1,), padding=[(pad, pad)],
        rhs_dilation=(dilation,), dimension_numbers=("NCH", "OIH", "NCH"))
    out = out + b[None, :, None]
    if rf % 2 == 0:
        out = out[:, :, :-1]
    return out


# --------------------------------- main ------------------------------------ #
if __name__ == "__main__":
    key = jax.random.PRNGKey(0)
    cases = [
        # (name, N, C_in, C_out, L, K, dilation, tile_l, bf16, tol)
        ("odd_rf",   2, 4, 8, 16,  3, 2, None, False, 1e-4),   # rf=5, pad=2
        ("even_rf",  2, 4, 8, 16,  4, 1, None, False, 1e-4),   # rf=4 -> trim
        ("ragged_L", 2, 4, 8, 400, 3, 2, 128,  False, 1e-4),   # multi-tile + ragged tail
        ("bf16_mxu", 2, 4, 8, 256, 3, 1, None, True,  5e-2),   # bf16 compute path
    ]
    keys = jax.random.split(key, len(cases))
    for (name, n, c_in, c_out, length, ksize, dil, tl, bf16, tol), ck in zip(
            cases, keys):
        k1, k2, k3 = jax.random.split(ck, 3)
        w = 0.1 * jax.random.normal(k1, (c_out, c_in, ksize), jnp.float32)
        b = 0.1 * jax.random.normal(k2, (c_out,), jnp.float32)
        x = jax.random.normal(k3, (n, c_in, length), jnp.float32)

        out = jax.block_until_ready(
            same_pad_conv1d(x, w, b, dil, tile_l=tl, compute_in_bf16=bf16))
        ref = jax.block_until_ready(_ref_same_pad_conv(x, w, b, dil))

        assert out.shape == ref.shape == (n, c_out, length), (name, out.shape)
        err = float(jnp.max(jnp.abs(out - ref)))
        assert err < tol, (name, err)

    print("KERNEL_OK")
</pallas_src>

<mosaic_0001>
module attributes {stable_mosaic.version = 11 : i64} {
  func.func @_same_pad_conv_kernel(%arg0: i32, %arg1: i32, %arg2: memref<1x4x128xf32, #tpu.memory_space<vmem>>, %arg3: memref<1x4x128xf32, #tpu.memory_space<vmem>>, %arg4: memref<3x8x4xf32, #tpu.memory_space<vmem>>, %arg5: memref<8x1xf32, #tpu.memory_space<vmem>>, %arg6: memref<1x8x128xf32, #tpu.memory_space<vmem>>, %arg7: memref<4x256xf32, #tpu.memory_space<vmem>>) attributes {dimension_semantics = [#tpu.dimension_semantics<parallel>, #tpu.dimension_semantics<parallel>], iteration_bounds = array<i64: 2, 1>, scalar_prefetch = 0 : i64, scratch_operands = 1 : i64, tpu.core_type = #tpu.core_type<tc>, window_params = [{transform_indices = @transform_0, window_bounds = array<i64: 1, 4, 128>}, {transform_indices = @transform_1, window_bounds = array<i64: 1, 4, 128>}, {pipeline_mode = #tpu.pipeline_mode<synchronous>, transform_indices = @transform_2, window_bounds = array<i64: 3, 8, 4>}, {pipeline_mode = #tpu.pipeline_mode<synchronous>, transform_indices = @transform_3, window_bounds = array<i64: 8, 1>}, {transform_indices = @transform_4, window_bounds = array<i64: 1, 8, 128>}]} {
    %c0 = arith.constant 0 : index
    %c0_0 = arith.constant 0 : index
    %c0_1 = arith.constant 0 : index
    %0 = vector.load %arg2[%c0, %c0_0, %c0_1] : memref<1x4x128xf32, #tpu.memory_space<vmem>>, vector<1x4x128xf32>
    %1 = vector.shape_cast %0 : vector<1x4x128xf32> to vector<4x128xf32>
    %c0_2 = arith.constant 0 : index
    %c0_3 = arith.constant 0 : index
    %2 = vector.load %arg7[%c0_2, %c0_3] : memref<4x256xf32, #tpu.memory_space<vmem>>, vector<4x128xf32>
    tpu.vector_store %arg7[%c0_2, %c0_3], %1 {strides = array<i32>} : memref<4x256xf32, #tpu.memory_space<vmem>>, vector<4x128xf32>,
    %c0_4 = arith.constant 0 : index
    %c0_5 = arith.constant 0 : index
    %c0_6 = arith.constant 0 : index
    %3 = vector.load %arg3[%c0_4, %c0_5, %c0_6] : memref<1x4x128xf32, #tpu.memory_space<vmem>>, vector<1x4x128xf32>
    %4 = vector.shape_cast %3 : vector<1x4x128xf32> to vector<4x128xf32>
    %c0_7 = arith.constant 0 : index
    %c128 = arith.constant 128 : index
    %5 = vector.load %arg7[%c0_7, %c128] : memref<4x256xf32, #tpu.memory_space<vmem>>, vector<4x128xf32>
    tpu.vector_store %arg7[%c0_7, %c128], %4 {strides = array<i32>} : memref<4x256xf32, #tpu.memory_space<vmem>>, vector<4x128xf32>,
    %c0_8 = arith.constant 0 : index
    %c0_9 = arith.constant 0 : index
    %c0_10 = arith.constant 0 : index
    %6 = vector.load %arg4[%c0_8, %c0_9, %c0_10] : memref<3x8x4xf32, #tpu.memory_space<vmem>>, vector<1x8x4xf32>
    %7 = vector.shape_cast %6 : vector<1x8x4xf32> to vector<8x4xf32>
    %c0_11 = arith.constant 0 : index
    %c0_12 = arith.constant 0 : index
    %8 = vector.load %arg7[%c0_11, %c0_12] : memref<4x256xf32, #tpu.memory_space<vmem>>, vector<4x128xf32>
    %cst = arith.constant dense<0.000000e+00> : vector<8x128xf32>
    %9 = tpu.matmul %7, %8, %cst {dimension_numbers = #tpu.dot_dimension_numbers<[1], [0], [0], [1], [0, 0, 1, 1], [], []>} : vector<8x4xf32>, vector<4x128xf32>, vector<8x128xf32> -> vector<8x128xf32>
    %c1 = arith.constant 1 : index
    %c0_13 = arith.constant 0 : index
    %c0_14 = arith.constant 0 : index
    %10 = vector.load %arg4[%c1, %c0_13, %c0_14] : memref<3x8x4xf32, #tpu.memory_space<vmem>>, vector<1x8x4xf32>
    %11 = vector.shape_cast %10 : vector<1x8x4xf32> to vector<8x4xf32>
    %c0_15 = arith.constant 0 : index
    %c2 = arith.constant 2 : index
    %12 = vector.load %arg7[%c0_15, %c2] : memref<4x256xf32, #tpu.memory_space<vmem>>, vector<4x128xf32>
    %cst_16 = arith.constant dense<0.000000e+00> : vector<8x128xf32>
    %13 = tpu.matmul %11, %12, %cst_16 {dimension_numbers = #tpu.dot_dimension_numbers<[1], [0], [0], [1], [0, 0, 1, 1], [], []>} : vector<8x4xf32>, vector<4x128xf32>, vector<8x128xf32> -> vector<8x128xf32>
    %14 = arith.addf %9, %13 : vector<8x128xf32>
    %c2_17 = arith.constant 2 : index
    %c0_18 = arith.constant 0 : index
    %c0_19 = arith.constant 0 : index
    %15 = vector.load %arg4[%c2_17, %c0_18, %c0_19] : memref<3x8x4xf32, #tpu.memory_space<vmem>>, vector<1x8x4xf32>
    %16 = vector.shape_cast %15 : vector<1x8x4xf32> to vector<8x4xf32>
    %c0_20 = arith.constant 0 : index
    %c4 = arith.constant 4 : index
    %17 = vector.load %arg7[%c0_20, %c4] : memref<4x256xf32, #tpu.memory_space<vmem>>, vector<4x128xf32>
    %cst_21 = arith.constant dense<0.000000e+00> : vector<8x128xf32>
    %18 = tpu.matmul %16, %17, %cst_21 {dimension_numbers = #tpu.dot_dimension_numbers<[1], [0], [0], [1], [0, 0, 1, 1], [], []>} : vector<8x4xf32>, vector<4x128xf32>, vector<8x128xf32> -> vector<8x128xf32>
    %19 = arith.addf %14, %18 : vector<8x128xf32>
    %c0_22 = arith.constant 0 : index
    %c0_23 = arith.constant 0 : index
    %20 = vector.load %arg5[%c0_22, %c0_23] : memref<8x1xf32, #tpu.memory_space<vmem>>, vector<8x1xf32>
    %21 = vector.broadcast %20 : vector<8x1xf32> to vector<8x128xf32>
    %22 = arith.addf %19, %21 : vector<8x128xf32>
    %c0_24 = arith.constant 0 : index
    %c0_25 = arith.constant 0 : index
    %c0_26 = arith.constant 0 : index
    %23 = vector.load %arg6[%c0_24, %c0_25, %c0_26] : memref<1x8x128xf32, #tpu.memory_space<vmem>>, vector<1x8x128xf32>
    %24 = vector.shape_cast %23 : vector<1x8x128xf32> to vector<8x128xf32>
    %25 = vector.shape_cast %22 : vector<8x128xf32> to vector<1x8x128xf32>
    tpu.vector_store %arg6[%c0_24, %c0_25, %c0_26], %25 {strides = array<i32>} : memref<1x8x128xf32, #tpu.memory_space<vmem>>, vector<1x8x128xf32>,
    return
  }
  func.func @transform_0(%arg0: i32, %arg1: i32) -> (i32, i32, i32) {
    %c0_i32 = arith.constant 0 : i32
    %c0_i32_0 = arith.constant 0 : i32
    return %arg0, %c0_i32, %arg1 : i32, i32, i32
  }
  func.func @transform_1(%arg0: i32, %arg1: i32) -> (i32, i32, i32) {
    %c1_i32 = arith.constant 1 : i32
    %0 = arith.addi %arg1, %c1_i32 : i32
    %c1_i32_0 = arith.constant 1 : i32
    %1 = arith.muli %0, %c1_i32_0 : i32
    %c0_i32 = arith.constant 0 : i32
    %c0_i32_1 = arith.constant 0 : i32
    return %arg0, %c0_i32, %1 : i32, i32, i32
  }
  func.func @transform_2(%arg0: i32, %arg1: i32) -> (i32, i32, i32) {
    %c0_i32 = arith.constant 0 : i32
    %c0_i32_0 = arith.constant 0 : i32
    %c0_i32_1 = arith.constant 0 : i32
    %c0_i32_2 = arith.constant 0 : i32
    return %c0_i32, %c0_i32_0, %c0_i32_1 : i32, i32, i32
  }
  func.func @transform_3(%arg0: i32, %arg1: i32) -> (i32, i32) {
    %c0_i32 = arith.constant 0 : i32
    %c0_i32_0 = arith.constant 0 : i32
    %c0_i32_1 = arith.constant 0 : i32
    return %c0_i32, %c0_i32_0 : i32, i32
  }
  func.func @transform_4(%arg0: i32, %arg1: i32) -> (i32, i32, i32) {
    %c0_i32 = arith.constant 0 : i32
    %c0_i32_0 = arith.constant 0 : i32
    return %arg0, %c0_i32, %arg1 : i32, i32, i32
  }
}

</mosaic_0001>

<llo_original>
// kernel: tpu_custom_call.1
$region0: #{tpu_custom_call.1}
  #allocation0 [shape = 'u32[]', space=smem, size = 0x4, offset = 0x4, fixed_abs, tag = 'smem constant byte address 0x4 - core index']
  #allocation1 [shape = 'u32[72,128]{1,0:T(1,128)}', space=vmem, size = 0x9000, scoped, tag = 'internal scratch']
  #allocation2 [shape = 'f32[4,256]{1,0:T(4,128)}', space=vmem, size = 0x1000, scoped, tag = 'scratch operand']
  %s0 = inlined_call_operand.vmem [shape: f32[2,4,256], index: 0, kind: input, shape index: {}]
  %s1 = inlined_call_operand.vmem [shape: f32[2,4,256], index: 1, kind: input, shape index: {}]
  %s2 = inlined_call_operand.vmem [shape: f32[3,8,4], index: 2, kind: input, shape index: {}]
  %s3 = inlined_call_operand.vmem [shape: f32[8,1], index: 3, kind: input, shape index: {}]
  %s4 = inlined_call_operand.hbm [shape: f32[2,8,16], index: 4, kind: output, shape index: {}]
  %s5 = sld [smem:[#allocation0]]
  $region49: #{tpu_custom_call.1} parent=0
    _
  %s7 = ssub.s32 1, %s5
  %s8 = scalar_select 0, %s7, %s5
  $region1: #{tpu_custom_call.1} parent=0
    #allocation3 [shape = 'u8[8192]{0}', space=vmem, size = 0x2000, scoped, tag = 'output window, operand 0']
    #allocation4 [shape = 's32[2]{0}', space=sflag, size = 0x8, scoped, tag = 'scoped memory for tpu_custom_call.1']
    %9 = vsyncpa [#allocation4], 0
    %s10 = scalar_lea.sflag [#allocation4], 1
    %11 = vsyncpa %s10, 0
    loop: start=0, step=1, limit=4
    $region2: #{tpu_custom_call.1} parent=1 // loop_pre_header
      _
    $region3: #{tpu_custom_call.1} parent=1 // loop_header
      %s13 = sphi 0, %s17
      %p14 = scmp.ge.s32.totalorder %s13, 4
      %s20 = sphi 0, %s32
      %s21 = sphi 0, %s28
      %s22 = sphi 0, %s20
      %s23 = sphi 0, %s21
      %s24 = sphi 0, %s22
      %s25 = sphi 0, %s23
      %s37 = sphi 0, %s39
      %s40 = sphi 0, %s37
      %s41 = sphi 0, %s40
      %s57 = sphi 0, %s41
      %s67 = sphi 0, %s69
      %s70 = sphi 0, %s67
      %s71 = sphi 0, %s70
      %s87 = sphi 0, %s71
      %s91 = sphi 0, %s91
      %s93 = sphi 0, %s91
      %s94 = sphi 0, %s93
      %s108 = sphi 0, %s94
      %s112 = sphi 0, %s112
      %s114 = sphi 0, %s112
      %s115 = sphi 0, %s114
      %s129 = sphi 0, %s115
      %s137 = sphi 0, %s139
      %s140 = sphi 0, %s137
      %s141 = sphi 0, %s140
      %s157 = sphi 0, %s141
    $region4: #{tpu_custom_call.1} parent=1 // loop_header_branch
      %16 = sbr.rel (%p14) target = $region8
    $region5: #{tpu_custom_call.1} parent=1 // loop_body
      %s18 = ssub.s32 %s13, 1
      %s19 = ssub.s32 %s13, 2
      %s26 = sadd.s32 1, %s21
      %p27 = scmp.ge.s32.totalorder %s26, 1
      %s28 = scalar_select %p27, 0, %s26
      %s29 = sadd.s32 1, %s20
      %s30 = scalar_select %p27, %s29, %s20
      %p31 = scmp.ge.s32.totalorder %s30, 2
      %s32 = scalar_select %p31, 0, %s30
      %s33 = ssub.s32 %s20, %s32
      %s34 = ssub.s32 %s21, %s28
      %s35 = sor.u32 %s33, %s34
      %p36 = scmp.eq.s32.totalorder %s35, 0
      %s38 = sadd.s32 %s37, 1
      %s39 = scalar_select %p36, %s37, %s38
      %p42 = pneg %p36
      %p43 = scmp.eq.s32.totalorder %s13, 1
      %p44 = por %p42, %p43
      %p45 = scmp.ne.s32.totalorder %s37, %s40
      %p46 = scmp.eq.s32.totalorder %s13, 0
      %p47 = por %p45, %p46
      %p48 = scmp.ne.s32.totalorder %s37, %s40
      %p49 = scmp.eq.s32.totalorder %s18, 1
      %p50 = por %p48, %p49
      %p51 = scmp.ne.s32.totalorder %s40, %s41
      %p52 = scmp.eq.s32.totalorder %s18, 0
      %p53 = por %p51, %p52
      %p54 = scmp.ne.s32.totalorder %s40, %s41
      %p55 = scmp.eq.s32.totalorder %s19, 1
      %p56 = por %p54, %p55
      %p58 = scmp.ne.s32.totalorder %s41, %s57
      %p59 = scmp.eq.s32.totalorder %s19, 0
      %p60 = por %p58, %p59
      %s61 = sadd.s32 %s21, 1
      %s62 = sadd.s32 %s28, 1
      %s63 = ssub.s32 %s20, %s32
      %s64 = ssub.s32 %s61, %s62
      %s65 = sor.u32 %s63, %s64
      %p66 = scmp.eq.s32.totalorder %s65, 0
      %s68 = sadd.s32 %s67, 1
      %s69 = scalar_select %p66, %s67, %s68
      %p72 = pneg %p66
      %p73 = scmp.eq.s32.totalorder %s13, 1
      %p74 = por %p72, %p73
      %p75 = scmp.ne.s32.totalorder %s67, %s70
      %p76 = scmp.eq.s32.totalorder %s13, 0
      %p77 = por %p75, %p76
      %p78 = scmp.ne.s32.totalorder %s67, %s70
      %p79 = scmp.eq.s32.totalorder %s18, 1
      %p80 = por %p78, %p79
      %p81 = scmp.ne.s32.totalorder %s70, %s71
      %p82 = scmp.eq.s32.totalorder %s18, 0
      %p83 = por %p81, %p82
      %p84 = scmp.ne.s32.totalorder %s70, %s71
      %p85 = scmp.eq.s32.totalorder %s19, 1
      %p86 = por %p84, %p85
      %p88 = scmp.ne.s32.totalorder %s71, %s87
      %p89 = scmp.eq.s32.totalorder %s19, 0
      %p90 = por %p88, %p89
      %s92 = sadd.s32 %s91, 1
      %p95 = scmp.eq.s32.totalorder %s13, 1
      %p96 = scmp.ne.s32.totalorder %s91, %s93
      %p97 = scmp.eq.s32.totalorder %s13, 0
      %p98 = por %p96, %p97
      %p99 = scmp.ne.s32.totalorder %s91, %s93
      %p100 = scmp.eq.s32.totalorder %s18, 1
      %p101 = por %p99, %p100
      %p102 = scmp.ne.s32.totalorder %s93, %s94
      %p103 = scmp.eq.s32.totalorder %s18, 0
      %p104 = por %p102, %p103
      %p105 = scmp.ne.s32.totalorder %s93, %s94
      %p106 = scmp.eq.s32.totalorder %s19, 1
      %p107 = por %p105, %p106
      %p109 = scmp.ne.s32.totalorder %s94, %s108
      %p110 = scmp.eq.s32.totalorder %s19, 0
      %p111 = por %p109, %p110
      %s113 = sadd.s32 %s112, 1
      %p116 = scmp.eq.s32.totalorder %s13, 1
      %p117 = scmp.ne.s32.totalorder %s112, %s114
      %p118 = scmp.eq.s32.totalorder %s13, 0
      %p119 = por %p117, %p118
      %p120 = scmp.ne.s32.totalorder %s112, %s114
      %p121 = scmp.eq.s32.totalorder %s18, 1
      %p122 = por %p120, %p121
      %p123 = scmp.ne.s32.totalorder %s114, %s115
      %p124 = scmp.eq.s32.totalorder %s18, 0
      %p125 = por %p123, %p124
      %p126 = scmp.ne.s32.totalorder %s114, %s115
      %p127 = scmp.eq.s32.totalorder %s19, 1
      %p128 = por %p126, %p127
      %p130 = scmp.ne.s32.totalorder %s115, %s129
      %p131 = scmp.eq.s32.totalorder %s19, 0
      %p132 = por %p130, %p131
      %s133 = ssub.s32 %s20, %s32
      %s134 = ssub.s32 %s21, %s28
      %s135 = sor.u32 %s133, %s134
      %p136 = scmp.eq.s32.totalorder %s135, 0
      %s138 = sadd.s32 %s137, 1
      %s139 = scalar_select %p136, %s137, %s138
      %p142 = pneg %p136
      %p143 = scmp.eq.s32.totalorder %s13, 1
      %p144 = por %p142, %p143
      %p145 = scmp.ne.s32.totalorder %s137, %s140
      %p146 = scmp.eq.s32.totalorder %s13, 0
      %p147 = por %p145, %p146
      %p148 = scmp.ne.s32.totalorder %s137, %s140
      %p149 = scmp.eq.s32.totalorder %s18, 1
      %p150 = por %p148, %p149
      %p151 = scmp.ne.s32.totalorder %s140, %s141
      %p152 = scmp.eq.s32.totalorder %s18, 0
      %p153 = por %p151, %p152
      %p154 = scmp.ne.s32.totalorder %s140, %s141
      %p155 = scmp.eq.s32.totalorder %s19, 1
      %p156 = por %p154, %p155
      %p158 = scmp.ne.s32.totalorder %s141, %s157
      %p159 = scmp.eq.s32.totalorder %s19, 0
      %p160 = por %p158, %p159
      %p161 = scmp.le.s32.totalorder 1, %s13
      %p162 = scmp.lt.s32.totalorder %s13, 3
      %p163 = pnand %p161, %p162
      %p164 = pneg %p163
      // Predicated region
      $region9: #{tpu_custom_call.1} parent=5 // pred_check
        _
      $region10: #{tpu_custom_call.1} parent=5 // pred_check_branch
        %166 = sbr.rel (%p163) target = $region12
      $region11: #{tpu_custom_call.1} parent=5 // pred_region
        %s167 = ssub.s32 %s13, 1
        // Predicated region
        $region13: #{tpu_custom_call.1} parent=11 // pred_check
          %p168 = pneg %p104
        $region14: #{tpu_custom_call.1} parent=11 // pred_check_branch
          %170 = sbr.rel (%p168) target = $region16
        $region15: #{tpu_custom_call.1} parent=11 // pred_region
          _
        $region16: #{tpu_custom_call.1} parent=11 // pred_fallthru
          _
        // Predicated region
        $region17: #{tpu_custom_call.1} parent=11 // pred_check
          %p171 = pneg %p125
        $region18: #{tpu_custom_call.1} parent=11 // pred_check_branch
          %173 = sbr.rel (%p171) target = $region20
        $region19: #{tpu_custom_call.1} parent=11 // pred_region
          _
        $region20: #{tpu_custom_call.1} parent=11 // pred_fallthru
          _
      $region12: #{tpu_custom_call.1} parent=5 // pred_fallthru
        _
      %p174 = scmp.lt.s32.totalorder %s13, 2
      // Predicated region
      $region21: #{tpu_custom_call.1} parent=5 // pred_check
        %p175 = pneg %p174
      $region22: #{tpu_custom_call.1} parent=5 // pred_check_branch
        %177 = sbr.rel (%p175) target = $region24
      $region23: #{tpu_custom_call.1} parent=5 // pred_region
        // Predicated region
        $region25: #{tpu_custom_call.1} parent=23 // pred_check
          %p178 = pneg %p47
        $region26: #{tpu_custom_call.1} parent=23 // pred_check_branch
          %180 = sbr.rel (%p178) target = $region28
        $region27: #{tpu_custom_call.1} parent=23 // pred_region
          %p181 = scmp.lt.s32.totalorder %s20, 1
          %s182 = scalar_select %p181, %s20, 1
          %p183 = scmp.lt.s32.totalorder %s21, 1
          %s184 = scalar_select %p183, %s21, 1
          %s185 = smul.addr %s182, 2
          %s186 = sadd.s32 %s184, %s185
          %s187 = smul.addr %s186, 4
          %s188 = scalar_lea.vmem %s0, %s187
        $region28: #{tpu_custom_call.1} parent=23 // pred_fallthru
          _
        // Predicated region
        $region29: #{tpu_custom_call.1} parent=23 // pred_check
          %p189 = pneg %p77
        $region30: #{tpu_custom_call.1} parent=23 // pred_check_branch
          %191 = sbr.rel (%p189) target = $region32
        $region31: #{tpu_custom_call.1} parent=23 // pred_region
          %s192 = sadd.s32 %s21, 1
          %p193 = scmp.lt.s32.totalorder %s20, 1
          %s194 = scalar_select %p193, %s20, 1
          %p195 = scmp.lt.s32.totalorder %s192, 1
          %s196 = scalar_select %p195, %s192, 1
          %s197 = smul.addr %s194, 2
          %s198 = sadd.s32 %s196, %s197
          %s199 = smul.addr %s198, 4
          %s200 = scalar_lea.vmem %s1, %s199
          %s201 = sadd.s32 %s21, 1
        $region32: #{tpu_custom_call.1} parent=23 // pred_fallthru
          _
      $region24: #{tpu_custom_call.1} parent=5 // pred_fallthru
        _
      %p202 = scmp.le.s32.totalorder 1, %s13
      %p203 = scmp.lt.s32.totalorder %s13, 3
      %p204 = pnand %p202, %p203
      %p205 = pneg %p204
      // Predicated region
      $region33: #{tpu_custom_call.1} parent=5 // pred_check
        _
      $region34: #{tpu_custom_call.1} parent=5 // pred_check_branch
        %207 = sbr.rel (%p204) target = $region36
      $region35: #{tpu_custom_call.1} parent=5 // pred_region
        %s208 = ssub.s32 %s13, 1
        %p209 = scmp.lt.s32.totalorder %s22, 1
        %s210 = scalar_select %p209, %s22, 1
        %p211 = scmp.lt.s32.totalorder %s23, 1
        %s212 = scalar_select %p211, %s23, 1
        %s213 = smul.addr %s210, 2
        %s214 = sadd.s32 %s212, %s213
        %s215 = smul.addr %s214, 4
        %s216 = scalar_lea.vmem %s0, %s215
        %p217 = pneg %p53
        %p218 = pneg %p50
        %s219 = sadd.s32 %s23, 1
        %p220 = scmp.lt.s32.totalorder %s22, 1
        %s221 = scalar_select %p220, %s22, 1
        %p222 = scmp.lt.s32.totalorder %s219, 1
        %s223 = scalar_select %p222, %s219, 1
        %s224 = smul.addr %s221, 2
        %s225 = sadd.s32 %s223, %s224
        %s226 = smul.addr %s225, 4
        %s227 = scalar_lea.vmem %s1, %s226
        %p228 = pneg %p83
        %p229 = pneg %p80
        %p230 = pneg %p104
        %p231 = pneg %p101
        %p232 = pneg %p125
        %p233 = pneg %p122
        %p234 = pneg %p153
        %p235 = pneg %p150
        %s236 = sand.u32 %s140, 1
        %s237 = scalar_lea.sflag [#allocation4], %s236
        %s238 = sand.u32 %s140, 1
        %s239 = smul.addr %s238, 8
        %s240 = scalar_lea.vmem [#allocation3], %s239
        %p241 = scmp.lt.s32.totalorder %s22, 1
        %s242 = scalar_select %p241, %s22, 1
        %p243 = scmp.lt.s32.totalorder %s23, 1
        %s244 = scalar_select %p243, %s23, 1
        %s245 = smul.addr %s242, 2
        %s246 = sadd.s32 %s244, %s245
        %s247 = smul.addr %s246, 4
        %s248 = scalar_lea.vmem %s0, %s247
        %s249 = sadd.s32 %s23, 1
        %p250 = scmp.lt.s32.totalorder %s22, 1
        %s251 = scalar_select %p250, %s22, 1
        %p252 = scmp.lt.s32.totalorder %s249, 1
        %s253 = scalar_select %p252, %s249, 1
        %s254 = smul.addr %s251, 2
        %s255 = sadd.s32 %s253, %s254
        %s256 = smul.addr %s255, 4
        %s257 = scalar_lea.vmem %s1, %s256
        %s258 = sadd.s32 %s23, 1
        %v259 = vld [vmem:[%s248] sm:$0xf]
        %260 = vst [vmem:[#allocation2] sm:$0xf] %v259
        %v261 = vld [vmem:[%s257] sm:$0xf]
        %262 = vst [vmem:[#allocation2 + $0x4] sm:$0xf] %v261
        %v263 = vld [vmem:[%s2] sm:$0xff]
        %v264 = vld [vmem:[#allocation2] sm:$0xf]
        %s265 = scalar_lea.vmem %s2, 8
        %v266 = vld [vmem:[%s265] sm:$0xff]
        %v267 = vld [vmem:[#allocation2] sm:$0xff]
        %269 = vst [vmem:[#allocation1] ss:$2 sm:$0xff] %v267
        %v270 = vld.sshfl [vmem:[#allocation1] sm:$0xff pattern:$0x75316420]
        %v271 = vld.sshfl [vmem:[#allocation1 + $0x8] sm:$0xff pattern:$0x75316420]
        %272 = vrot.lane.b32.xlu0 %v270, 126
        %v273 = vpop.permute.xlu0 %272
        %274 = vrot.lane.b32.xlu0 %v271, 126
        %v275 = vpop.permute.xlu0 %274
        %vm276 = vcmask 1031168
        %v277 = vsel %vm276, %v273, %v275
        %vm278 = vcmask 31744
        %v280 = vsel %vm278, %v266, 0
        %vm282 = vcmask 1043456
        %v283 = vsel %vm282, %v277, 0
        %285 = vmatpush.msra.mxu0 0.0
        %286 = vmatpush.msra.mxu0 0.0
        %287 = vmatpush.msra.mxu0 0.0
        %288 = vmatpush.msra.mxu0 0.0
        %289 = vmatpush.msra.mxu0 0.0
        %290 = vmatpush.msra.mxu0 0.0
        %291 = vmatpush.msra.mxu0 0.0
        %292 = vmatpush.msra.mxu0 0.0
        %293 = vmatpush.msra.mxu0 0.0
        %294 = vmatpush.msra.mxu0 0.0
        %295 = vmatpush.msra.mxu0 0.0
        %296 = vmatpush.msra.mxu0 0.0
        %297 = vmatpush.msra.mxu0 0.0
        %298 = vmatpush.msra.mxu0 0.0
        %299 = vmatpush.msra.mxu0 0.0
        %300 = vmatpush.msra.mxu0 %v283
        %301 = vmatmul.f32.gmra.mxu0 %v280
        %v302 = vpop.f32.mrf.mxu0
        %v303 = vadd.f32 0.0, %v302
        %304 = vdwg.mxu0
        %v306 = vsel %vm278, %v263, 0
        %v309 = vsel %vm282, %v264, 0
        %311 = vmatpush.msra.mxu0 0.0
        %312 = vmatpush.msra.mxu0 0.0
        %313 = vmatpush.msra.mxu0 0.0
        %314 = vmatpush.msra.mxu0 0.0
        %315 = vmatpush.msra.mxu0 0.0
        %316 = vmatpush.msra.mxu0 0.0
        %317 = vmatpush.msra.mxu0 0.0
        %318 = vmatpush.msra.mxu0 0.0
        %319 = vmatpush.msra.mxu0 0.0
        %320 = vmatpush.msra.mxu0 0.0
        %321 = vmatpush.msra.mxu0 0.0
        %322 = vmatpush.msra.mxu0 0.0
        %323 = vmatpush.msra.mxu0 0.0
        %324 = vmatpush.msra.mxu0 0.0
        %325 = vmatpush.msra.mxu0 0.0
        %326 = vmatpush.msra.mxu0 %v309
        %327 = vmatmul.f32.gmra.mxu0 %v306
        %v328 = vpop.f32.mrf.mxu0
        %v329 = vadd.f32 %v303, %v328
        %330 = vdwg.mxu0
        %s331 = scalar_lea.vmem %s2, 16
        %v332 = vld [vmem:[%s331] sm:$0xff]
        %v333 = vld [vmem:[#allocation2] sm:$0xff]
        %335 = vst [vmem:[#allocation1] ss:$2 sm:$0xff] %v333
        %v336 = vld.sshfl [vmem:[#allocation1] sm:$0xff pattern:$0x75316420]
        %v337 = vld.sshfl [vmem:[#allocation1 + $0x8] sm:$0xff pattern:$0x75316420]
        %338 = vrot.lane.b32.xlu0 %v336, 124
        %v339 = vpop.permute.xlu0 %338
        %340 = vrot.lane.b32.xlu0 %v337, 124
        %v341 = vpop.permute.xlu0 %340
        %vm342 = vcmask 1014784
        %v343 = vsel %vm342, %v339, %v341
        %v345 = vsel %vm278, %v332, 0
        %v347 = vsel %vm282, %v343, 0
        %349 = vmatpush.msra.mxu0 0.0
        %350 = vmatpush.msra.mxu0 0.0
        %351 = vmatpush.msra.mxu0 0.0
        %352 = vmatpush.msra.mxu0 0.0
        %353 = vmatpush.msra.mxu0 0.0
        %354 = vmatpush.msra.mxu0 0.0
        %355 = vmatpush.msra.mxu0 0.0
        %356 = vmatpush.msra.mxu0 0.0
        %357 = vmatpush.msra.mxu0 0.0
        %358 = vmatpush.msra.mxu0 0.0
        %359 = vmatpush.msra.mxu0 0.0
        %360 = vmatpush.msra.mxu0 0.0
        %361 = vmatpush.msra.mxu0 0.0
        %362 = vmatpush.msra.mxu0 0.0
        %363 = vmatpush.msra.mxu0 0.0
        %364 = vmatpush.msra.mxu0 %v347
        %365 = vmatmul.f32.gmra.mxu0 %v345
        %v366 = vpop.f32.mrf.mxu0
        %v367 = vadd.f32 0.0, %v366
        %368 = vdwg.mxu0
        %v369 = vadd.f32 %v329, %v367
        %v370 = vld [vmem:[%s3] sm:$0xff]
        %372 = vset.pattern.permute.xlu0 0
        %373 = vperm.xlu0 %372, %v370
        %v374 = vpop.permute.xlu0 %373
        %v376 = vadd.f32 %v369, %v374
        %377 = vst [vmem:[%s240] sm:$0xff] %v376
        %s378 = sand.u32 %s140, 1
        %s379 = scalar_lea.sflag [#allocation4], %s378
        %s380 = sand.u32 %s140, 1
        %s381 = smul.addr %s380, 8
        %s382 = scalar_lea.vmem [#allocation3], %s381
        // Predicated region
        $region37: #{tpu_custom_call.1} parent=35 // pred_check
          %p383 = pneg %p150
        $region38: #{tpu_custom_call.1} parent=35 // pred_check_branch
          %385 = sbr.rel (%p383) target = $region40
        $region39: #{tpu_custom_call.1} parent=35 // pred_region
          %387 = vsyncadd %s379, 0
          %s388 = sadd.s32 %s23, %s22
          %s389 = smul.addr %s388, 8
          %s390 = scalar_lea.hbm %s4, %s389
          %s392 = sshll.u32 %s382, 4
          %s393 = int_to_ptr.vmem [resolvable:$true] %s392
          %s394 = sshll.u32 %s390, 4
          %s395 = int_to_ptr.hbm [resolvable:$true] %s394
          %397 = dma.vmem_to_hbm [thread:$0]  %s393, 128, %s395, %s379
        $region40: #{tpu_custom_call.1} parent=35 // pred_fallthru
          _
      $region36: #{tpu_custom_call.1} parent=5 // pred_fallthru
        _
      %p398 = scmp.le.s32.totalorder 2, %s13
      // Predicated region
      $region41: #{tpu_custom_call.1} parent=5 // pred_check
        %p399 = pneg %p398
      $region42: #{tpu_custom_call.1} parent=5 // pred_check_branch
        %401 = sbr.rel (%p399) target = $region44
      $region43: #{tpu_custom_call.1} parent=5 // pred_region
        %s402 = ssub.s32 %s13, 2
        // Predicated region
        $region45: #{tpu_custom_call.1} parent=43 // pred_check
          %p403 = pneg %p156
        $region46: #{tpu_custom_call.1} parent=43 // pred_check_branch
          %405 = sbr.rel (%p403) target = $region48
        $region47: #{tpu_custom_call.1} parent=43 // pred_region
          %s406 = sand.u32 %s141, 1
          %s407 = scalar_lea.sflag [#allocation4], %s406
          %s408 = sand.u32 %s141, 1
          %s409 = smul.addr %s408, 8
          %s410 = scalar_lea.vmem [#allocation3], %s409
          %412 = dma.done %s407, 128
        $region48: #{tpu_custom_call.1} parent=43 // pred_fallthru
          _
      $region44: #{tpu_custom_call.1} parent=5 // pred_fallthru
        _
    $region6: #{tpu_custom_call.1} parent=1 // loop_footer
      %s17 = sadd.s32 1, %s13
    $region7: #{tpu_custom_call.1} parent=1 // loop_footer_branch
      %12 = sbr.rel target = $region3
    $region8: #{tpu_custom_call.1} parent=1 // loop_exit
      _
    %413 = vsyncpa [#allocation4], 1
    %s414 = scalar_lea.sflag [#allocation4], 1
    %415 = vsyncpa %s414, 1

</llo_original>
